<compile_context>
chip_gen: v6e
topology: v6e:2x2x1
jax: 0.10.0
libtpu: 0.0.40
codegen_flags: <defaults>
</compile_context>

<pallas_src>
import functools
import math

import numpy as np

import jax
import jax.numpy as jnp
from jax.experimental import pallas as pl
from jax.experimental.pallas import tpu as pltpu


# ----------------------------------------------------------------------------
# Interpolation-matrix construction (trace-time numpy -> compile-time consts).
# Matches PyTorch upsample_bicubic2d / upsample_bilinear2d / upsample_nearest2d.
# ----------------------------------------------------------------------------
_CUBIC_A = -0.75  # PyTorch's bicubic 'a'


def _cubic_w1(x, a=_CUBIC_A):  # |x| <= 1
    return ((a + 2.0) * x - (a + 3.0)) * x * x + 1.0


def _cubic_w2(x, a=_CUBIC_A):  # 1 < |x| < 2
    return ((a * x - 5.0 * a) * x + 8.0 * a) * x - 4.0 * a


def _interp_matrix(in_size, out_size, scale, mode, align_corners):
    """Return M (out_size, in_size) with  y = M @ x  == 1-D PyTorch resize."""
    dst = np.arange(out_size, dtype=np.float64)
    rows = np.arange(out_size)

    if mode == "nearest":
        src = np.floor(dst * (in_size / out_size)).astype(np.int64)
        src = np.clip(src, 0, in_size - 1)
        m = np.zeros((out_size, in_size), np.float32)
        m[rows, src] = 1.0
        return m

    if align_corners:
        s = 0.0 if out_size <= 1 else (in_size - 1) / (out_size - 1)
        srcf = s * dst
    else:
        srcf = scale * (dst + 0.5) - 0.5

    m = np.zeros((out_size, in_size), np.float32)

    if mode == "bilinear":
        if not align_corners:
            srcf = np.maximum(srcf, 0.0)
        i0 = np.floor(srcf).astype(np.int64)
        t = srcf - i0
        i0 = np.clip(i0, 0, in_size - 1)
        i1 = np.minimum(i0 + 1, in_size - 1)
        np.add.at(m, (rows, i0), (1.0 - t).astype(np.float32))
        np.add.at(m, (rows, i1), t.astype(np.float32))
        return m

    if mode == "bicubic":
        i0 = np.floor(srcf).astype(np.int64)
        t = srcf - i0
        w = np.stack(
            [_cubic_w2(t + 1.0), _cubic_w1(t), _cubic_w1(1.0 - t), _cubic_w2(2.0 - t)],
            axis=1,
        )                                                  # (out, 4)
        idx = i0[:, None] + np.arange(-1, 3)[None, :]      # (out, 4) taps
        idx = np.clip(idx, 0, in_size - 1)                 # border clamp -> fold weights
        np.add.at(m, (np.repeat(rows, 4), idx.reshape(-1)),
                  w.reshape(-1).astype(np.float32))
        return m

    raise ValueError(f"unsupported mode: {mode}")


# ----------------------------------------------------------------------------
# Pallas kernel: per grid step, a tile of G images (B*C axis).
#   pass 1: per-image height dot into f32 scratch
#   pass 2: one flat width dot over the whole tile
# ----------------------------------------------------------------------------
def _upsample_kernel(x_ref, ah_ref, awt_ref, o_ref, t_ref):
    ah = ah_ref[...]                    # (H_out, H_in)  f32, VMEM-resident
    awt = awt_ref[...]                  # (W_in,  W_out) f32, VMEM-resident
    g = x_ref.shape[0]
    h_out = ah.shape[0]
    w_out = awt.shape[1]

    # Pass 1 (height): small per-image MXU dots -> f32 scratch (G*H_out, W_in).
    for i in range(g):                  # static unroll, G is small
        t_ref[pl.ds(i * h_out, h_out), :] = jnp.dot(
            ah, x_ref[i], preferred_element_type=jnp.float32)

    # Pass 2 (width): single flat MXU dot covering all images of the tile.
    res = jnp.dot(t_ref[...], awt, preferred_element_type=jnp.float32)
    o_ref[...] = res.reshape(g, h_out, w_out).astype(o_ref.dtype)


def _choose_group(bc, h_in, w_in, h_out, w_out, in_item, out_item,
                  budget_bytes=8 << 20, max_group=64):
    """Images per grid step: bounded VMEM (incl. double-buffering + scratch),
    bounded unroll, and divides B*C."""
    per_img = (2 * h_in * w_in * in_item        # input tile, double-buffered
               + 2 * h_out * w_out * out_item   # output tile, double-buffered
               + 4 * h_out * w_in)              # f32 scratch
    g = max(1, min(bc, max_group, budget_bytes // max(per_img, 1)))
    while bc % g != 0:
        g -= 1
    return g


# ----------------------------------------------------------------------------
# Public wrapper — UpSampleLayer.forward semantics (NCHW in / NCHW out).
# ----------------------------------------------------------------------------
def upsample_layer(x, mode="bicubic", size=None, factor=2, align_corners=False):
    B, C, H, W = x.shape

    if size is not None:
        if isinstance(size, (tuple, list)):
            out_h, out_w = int(size[0]), int(size[1])
        else:
            out_h = out_w = int(size)
        if (H, W) == (out_h, out_w):      # identity shortcut of the module
            return x
        scale_h, scale_w = H / out_h, W / out_w
    else:
        if factor == 1:                   # identity shortcut of the module
            return x
        out_h = int(math.floor(H * factor))
        out_w = int(math.floor(W * factor))
        scale_h = scale_w = 1.0 / float(factor)

    # Keep native float dtype over HBM (bf16 stays bf16); ints -> f32.
    if x.dtype not in (jnp.float32, jnp.bfloat16):
        x = x.astype(jnp.float32)

    # Trace-time constants (exact PyTorch interpolation weights), f32.
    ah = jnp.asarray(_interp_matrix(H, out_h, scale_h, mode, align_corners))        # (H_out, H_in)
    awt = jnp.asarray(_interp_matrix(W, out_w, scale_w, mode, align_corners).T)     # (W_in, W_out)

    bc = B * C
    x3 = x.reshape(bc, H, W)                                   # free leading-dim merge
    item = x3.dtype.itemsize
    G = _choose_group(bc, H, W, out_h, out_w, item, item)
    grid = (bc // G,)

    flops = 2 * bc * (out_h * H * W + out_h * W * out_w)
    bytes_accessed = (bc * H * W * item
                      + bc * out_h * out_w * item
                      + 4 * (out_h * H + W * out_w))

    out = pl.pallas_call(
        _upsample_kernel,
        out_shape=jax.ShapeDtypeStruct((bc, out_h, out_w), x3.dtype),
        grid=grid,
        in_specs=[
            pl.BlockSpec((G, H, W), lambda i: (i, 0, 0)),      # pipelined image tile
            pl.BlockSpec((out_h, H), lambda i: (0, 0)),        # A_h   (VMEM-resident)
            pl.BlockSpec((W, out_w), lambda i: (0, 0)),        # A_w^T (VMEM-resident)
        ],
        out_specs=pl.BlockSpec((G, out_h, out_w), lambda i: (i, 0, 0)),
        scratch_shapes=[pltpu.VMEM((G * out_h, W), jnp.float32)],
        compiler_params=pltpu.CompilerParams(dimension_semantics=("parallel",)),
        cost_estimate=pl.CostEstimate(flops=flops, transcendentals=0,
                                      bytes_accessed=bytes_accessed),
    )(x3, ah, awt)

    return out.reshape(B, C, out_h, out_w)


# ----------------------------------------------------------------------------
if __name__ == "__main__":
    key = jax.random.PRNGKey(0)
    B, C, H, W = 2, 4, 16, 16
    x = jax.random.normal(key, (B, C, H, W), jnp.float32)

    fwd = jax.jit(functools.partial(upsample_layer, mode="bicubic",
                                    factor=2, align_corners=False))
    y = fwd(x)
    jax.block_until_ready(y)

    assert y.shape == (B, C, 2 * H, 2 * W) and y.dtype == jnp.float32
    assert bool(jnp.isfinite(y).all())

    # Pure-JAX reference using the same interpolation matrices (plumbing check).
    ah_ref = jnp.asarray(_interp_matrix(H, 2 * H, 0.5, "bicubic", False))
    awt_ref = jnp.asarray(_interp_matrix(W, 2 * W, 0.5, "bicubic", False).T)
    y_ref = jnp.einsum("oh,bchw,wk->bcok", ah_ref, x, awt_ref,
                       precision=jax.lax.Precision.HIGHEST)
    assert bool(jnp.allclose(y, y_ref, atol=1e-3, rtol=1e-3))

    # Identity shortcuts of the module.
    assert upsample_layer(x, factor=1) is x
    assert upsample_layer(x, size=(H, W)) is x

    print("KERNEL_OK")
</pallas_src>

<mosaic_0001>
module attributes {stable_mosaic.version = 11 : i64} {
  func.func @_upsample_kernel(%arg0: i32, %arg1: memref<8x16x16xf32, #tpu.memory_space<vmem>>, %arg2: memref<32x16xf32, #tpu.memory_space<vmem>>, %arg3: memref<16x32xf32, #tpu.memory_space<vmem>>, %arg4: memref<8x32x32xf32, #tpu.memory_space<vmem>>, %arg5: memref<256x16xf32, #tpu.memory_space<vmem>>) attributes {dimension_semantics = [#tpu.dimension_semantics<parallel>], iteration_bounds = array<i64: 1>, scalar_prefetch = 0 : i64, scratch_operands = 1 : i64, tpu.core_type = #tpu.core_type<tc>, window_params = [{transform_indices = @transform_0, window_bounds = array<i64: 8, 16, 16>}, {pipeline_mode = #tpu.pipeline_mode<synchronous>, transform_indices = @transform_1, window_bounds = array<i64: 32, 16>}, {pipeline_mode = #tpu.pipeline_mode<synchronous>, transform_indices = @transform_2, window_bounds = array<i64: 16, 32>}, {transform_indices = @transform_3, window_bounds = array<i64: 8, 32, 32>}]} {
    %c0 = arith.constant 0 : index
    %c0_0 = arith.constant 0 : index
    %0 = vector.load %arg2[%c0, %c0_0] : memref<32x16xf32, #tpu.memory_space<vmem>>, vector<32x16xf32>
    %c0_1 = arith.constant 0 : index
    %c0_2 = arith.constant 0 : index
    %1 = vector.load %arg3[%c0_1, %c0_2] : memref<16x32xf32, #tpu.memory_space<vmem>>, vector<16x32xf32>
    %c0_3 = arith.constant 0 : index
    %c0_4 = arith.constant 0 : index
    %c0_5 = arith.constant 0 : index
    %2 = vector.load %arg1[%c0_3, %c0_4, %c0_5] : memref<8x16x16xf32, #tpu.memory_space<vmem>>, vector<1x16x16xf32>
    %3 = vector.shape_cast %2 : vector<1x16x16xf32> to vector<16x16xf32>
    %cst = arith.constant dense<0.000000e+00> : vector<32x16xf32>
    %4 = tpu.matmul %0, %3, %cst {dimension_numbers = #tpu.dot_dimension_numbers<[1], [0], [0], [1], [0, 0, 1, 1], [], []>} : vector<32x16xf32>, vector<16x16xf32>, vector<32x16xf32> -> vector<32x16xf32>
    %c0_6 = arith.constant 0 : index
    %c0_7 = arith.constant 0 : index
    %5 = vector.load %arg5[%c0_6, %c0_7] : memref<256x16xf32, #tpu.memory_space<vmem>>, vector<32x16xf32>
    tpu.vector_store %arg5[%c0_6, %c0_7], %4 {strides = array<i32>} : memref<256x16xf32, #tpu.memory_space<vmem>>, vector<32x16xf32>,
    %c1 = arith.constant 1 : index
    %c0_8 = arith.constant 0 : index
    %c0_9 = arith.constant 0 : index
    %6 = vector.load %arg1[%c1, %c0_8, %c0_9] : memref<8x16x16xf32, #tpu.memory_space<vmem>>, vector<1x16x16xf32>
    %7 = vector.shape_cast %6 : vector<1x16x16xf32> to vector<16x16xf32>
    %cst_10 = arith.constant dense<0.000000e+00> : vector<32x16xf32>
    %8 = tpu.matmul %0, %7, %cst_10 {dimension_numbers = #tpu.dot_dimension_numbers<[1], [0], [0], [1], [0, 0, 1, 1], [], []>} : vector<32x16xf32>, vector<16x16xf32>, vector<32x16xf32> -> vector<32x16xf32>
    %c32 = arith.constant 32 : index
    %c0_11 = arith.constant 0 : index
    %9 = vector.load %arg5[%c32, %c0_11] : memref<256x16xf32, #tpu.memory_space<vmem>>, vector<32x16xf32>
    tpu.vector_store %arg5[%c32, %c0_11], %8 {strides = array<i32>} : memref<256x16xf32, #tpu.memory_space<vmem>>, vector<32x16xf32>,
    %c2 = arith.constant 2 : index
    %c0_12 = arith.constant 0 : index
    %c0_13 = arith.constant 0 : index
    %10 = vector.load %arg1[%c2, %c0_12, %c0_13] : memref<8x16x16xf32, #tpu.memory_space<vmem>>, vector<1x16x16xf32>
    %11 = vector.shape_cast %10 : vector<1x16x16xf32> to vector<16x16xf32>
    %cst_14 = arith.constant dense<0.000000e+00> : vector<32x16xf32>
    %12 = tpu.matmul %0, %11, %cst_14 {dimension_numbers = #tpu.dot_dimension_numbers<[1], [0], [0], [1], [0, 0, 1, 1], [], []>} : vector<32x16xf32>, vector<16x16xf32>, vector<32x16xf32> -> vector<32x16xf32>
    %c64 = arith.constant 64 : index
    %c0_15 = arith.constant 0 : index
    %13 = vector.load %arg5[%c64, %c0_15] : memref<256x16xf32, #tpu.memory_space<vmem>>, vector<32x16xf32>
    tpu.vector_store %arg5[%c64, %c0_15], %12 {strides = array<i32>} : memref<256x16xf32, #tpu.memory_space<vmem>>, vector<32x16xf32>,
    %c3 = arith.constant 3 : index
    %c0_16 = arith.constant 0 : index
    %c0_17 = arith.constant 0 : index
    %14 = vector.load %arg1[%c3, %c0_16, %c0_17] : memref<8x16x16xf32, #tpu.memory_space<vmem>>, vector<1x16x16xf32>
    %15 = vector.shape_cast %14 : vector<1x16x16xf32> to vector<16x16xf32>
    %cst_18 = arith.constant dense<0.000000e+00> : vector<32x16xf32>
    %16 = tpu.matmul %0, %15, %cst_18 {dimension_numbers = #tpu.dot_dimension_numbers<[1], [0], [0], [1], [0, 0, 1, 1], [], []>} : vector<32x16xf32>, vector<16x16xf32>, vector<32x16xf32> -> vector<32x16xf32>
    %c96 = arith.constant 96 : index
    %c0_19 = arith.constant 0 : index
    %17 = vector.load %arg5[%c96, %c0_19] : memref<256x16xf32, #tpu.memory_space<vmem>>, vector<32x16xf32>
    tpu.vector_store %arg5[%c96, %c0_19], %16 {strides = array<i32>} : memref<256x16xf32, #tpu.memory_space<vmem>>, vector<32x16xf32>,
    %c4 = arith.constant 4 : index
    %c0_20 = arith.constant 0 : index
    %c0_21 = arith.constant 0 : index
    %18 = vector.load %arg1[%c4, %c0_20, %c0_21] : memref<8x16x16xf32, #tpu.memory_space<vmem>>, vector<1x16x16xf32>
    %19 = vector.shape_cast %18 : vector<1x16x16xf32> to vector<16x16xf32>
    %cst_22 = arith.constant dense<0.000000e+00> : vector<32x16xf32>
    %20 = tpu.matmul %0, %19, %cst_22 {dimension_numbers = #tpu.dot_dimension_numbers<[1], [0], [0], [1], [0, 0, 1, 1], [], []>} : vector<32x16xf32>, vector<16x16xf32>, vector<32x16xf32> -> vector<32x16xf32>
    %c128 = arith.constant 128 : index
    %c0_23 = arith.constant 0 : index
    %21 = vector.load %arg5[%c128, %c0_23] : memref<256x16xf32, #tpu.memory_space<vmem>>, vector<32x16xf32>
    tpu.vector_store %arg5[%c128, %c0_23], %20 {strides = array<i32>} : memref<256x16xf32, #tpu.memory_space<vmem>>, vector<32x16xf32>,
    %c5 = arith.constant 5 : index
    %c0_24 = arith.constant 0 : index
    %c0_25 = arith.constant 0 : index
    %22 = vector.load %arg1[%c5, %c0_24, %c0_25] : memref<8x16x16xf32, #tpu.memory_space<vmem>>, vector<1x16x16xf32>
    %23 = vector.shape_cast %22 : vector<1x16x16xf32> to vector<16x16xf32>
    %cst_26 = arith.constant dense<0.000000e+00> : vector<32x16xf32>
    %24 = tpu.matmul %0, %23, %cst_26 {dimension_numbers = #tpu.dot_dimension_numbers<[1], [0], [0], [1], [0, 0, 1, 1], [], []>} : vector<32x16xf32>, vector<16x16xf32>, vector<32x16xf32> -> vector<32x16xf32>
    %c160 = arith.constant 160 : index
    %c0_27 = arith.constant 0 : index
    %25 = vector.load %arg5[%c160, %c0_27] : memref<256x16xf32, #tpu.memory_space<vmem>>, vector<32x16xf32>
    tpu.vector_store %arg5[%c160, %c0_27], %24 {strides = array<i32>} : memref<256x16xf32, #tpu.memory_space<vmem>>, vector<32x16xf32>,
    %c6 = arith.constant 6 : index
    %c0_28 = arith.constant 0 : index
    %c0_29 = arith.constant 0 : index
    %26 = vector.load %arg1[%c6, %c0_28, %c0_29] : memref<8x16x16xf32, #tpu.memory_space<vmem>>, vector<1x16x16xf32>
    %27 = vector.shape_cast %26 : vector<1x16x16xf32> to vector<16x16xf32>
    %cst_30 = arith.constant dense<0.000000e+00> : vector<32x16xf32>
    %28 = tpu.matmul %0, %27, %cst_30 {dimension_numbers = #tpu.dot_dimension_numbers<[1], [0], [0], [1], [0, 0, 1, 1], [], []>} : vector<32x16xf32>, vector<16x16xf32>, vector<32x16xf32> -> vector<32x16xf32>
    %c192 = arith.constant 192 : index
    %c0_31 = arith.constant 0 : index
    %29 = vector.load %arg5[%c192, %c0_31] : memref<256x16xf32, #tpu.memory_space<vmem>>, vector<32x16xf32>
    tpu.vector_store %arg5[%c192, %c0_31], %28 {strides = array<i32>} : memref<256x16xf32, #tpu.memory_space<vmem>>, vector<32x16xf32>,
    %c7 = arith.constant 7 : index
    %c0_32 = arith.constant 0 : index
    %c0_33 = arith.constant 0 : index
    %30 = vector.load %arg1[%c7, %c0_32, %c0_33] : memref<8x16x16xf32, #tpu.memory_space<vmem>>, vector<1x16x16xf32>
    %31 = vector.shape_cast %30 : vector<1x16x16xf32> to vector<16x16xf32>
    %cst_34 = arith.constant dense<0.000000e+00> : vector<32x16xf32>
    %32 = tpu.matmul %0, %31, %cst_34 {dimension_numbers = #tpu.dot_dimension_numbers<[1], [0], [0], [1], [0, 0, 1, 1], [], []>} : vector<32x16xf32>, vector<16x16xf32>, vector<32x16xf32> -> vector<32x16xf32>
    %c224 = arith.constant 224 : index
    %c0_35 = arith.constant 0 : index
    %33 = vector.load %arg5[%c224, %c0_35] : memref<256x16xf32, #tpu.memory_space<vmem>>, vector<32x16xf32>
    tpu.vector_store %arg5[%c224, %c0_35], %32 {strides = array<i32>} : memref<256x16xf32, #tpu.memory_space<vmem>>, vector<32x16xf32>,
    %c0_36 = arith.constant 0 : index
    %c0_37 = arith.constant 0 : index
    %34 = vector.load %arg5[%c0_36, %c0_37] : memref<256x16xf32, #tpu.memory_space<vmem>>, vector<256x16xf32>
    %cst_38 = arith.constant dense<0.000000e+00> : vector<256x32xf32>
    %35 = tpu.matmul %34, %1, %cst_38 {dimension_numbers = #tpu.dot_dimension_numbers<[1], [0], [0], [1], [0, 0, 1, 1], [], []>} : vector<256x16xf32>, vector<16x32xf32>, vector<256x32xf32> -> vector<256x32xf32>
    %36 = vector.shape_cast %35 : vector<256x32xf32> to vector<8x32x32xf32>
    %c0_39 = arith.constant 0 : index
    %c0_40 = arith.constant 0 : index
    %c0_41 = arith.constant 0 : index
    %37 = vector.load %arg4[%c0_39, %c0_40, %c0_41] : memref<8x32x32xf32, #tpu.memory_space<vmem>>, vector<8x32x32xf32>
    tpu.vector_store %arg4[%c0_39, %c0_40, %c0_41], %36 {strides = array<i32>} : memref<8x32x32xf32, #tpu.memory_space<vmem>>, vector<8x32x32xf32>,
    return
  }
  func.func @transform_0(%arg0: i32) -> (i32, i32, i32) {
    %c0_i32 = arith.constant 0 : i32
    %c0_i32_0 = arith.constant 0 : i32
    %c0_i32_1 = arith.constant 0 : i32
    return %arg0, %c0_i32, %c0_i32_0 : i32, i32, i32
  }
  func.func @transform_1(%arg0: i32) -> (i32, i32) {
    %c0_i32 = arith.constant 0 : i32
    %c0_i32_0 = arith.constant 0 : i32
    %c0_i32_1 = arith.constant 0 : i32
    return %c0_i32, %c0_i32_0 : i32, i32
  }
  func.func @transform_2(%arg0: i32) -> (i32, i32) {
    %c0_i32 = arith.constant 0 : i32
    %c0_i32_0 = arith.constant 0 : i32
    %c0_i32_1 = arith.constant 0 : i32
    return %c0_i32, %c0_i32_0 : i32, i32
  }
  func.func @transform_3(%arg0: i32) -> (i32, i32, i32) {
    %c0_i32 = arith.constant 0 : i32
    %c0_i32_0 = arith.constant 0 : i32
    %c0_i32_1 = arith.constant 0 : i32
    return %arg0, %c0_i32, %c0_i32_0 : i32, i32, i32
  }
}

</mosaic_0001>

<llo_original>
// kernel: upsample_layer.1
$region0: #{upsample_layer.1}
  #allocation0 [shape = 'u32[]', space=smem, size = 0x4, offset = 0x4, fixed_abs, tag = 'smem constant byte address 0x4 - core index']
  #allocation1 [shape = 'u32[144,128]{1,0:T(1,128)}', space=vmem, size = 0x12000, scoped, tag = 'internal scratch']
  #allocation2 [shape = 'f32[256,16]{1,0:T(8,128)}', space=vmem, size = 0x20000, scoped, tag = 'scratch operand']
  %s0 = inlined_call_operand.hbm [shape: f32[8,16,16], index: 0, kind: input, shape index: {}]
  %s1 = inlined_call_operand.hbm [shape: f32[32,16], index: 1, kind: input, shape index: {}]
  %s2 = inlined_call_operand.hbm [shape: f32[16,32], index: 2, kind: input, shape index: {}]
  %s3 = inlined_call_operand.hbm [shape: f32[8,32,32], index: 3, kind: output, shape index: {}]
  %s4 = sld [smem:[#allocation0]]
  $region34: #{upsample_layer.1} parent=0
    _
  %s6 = ssub.s32 1, %s4
  %s7 = scalar_select 0, %s6, %s4
  $region1: #{upsample_layer.1} parent=0
    #allocation3 [shape = 'u8[65536]{0}', space=vmem, size = 0x10000, scoped, tag = 'input window, operand 0, single buffered']
    #allocation4 [shape = 's32[1]{0}', space=sflag, size = 0x4, scoped, tag = 'scoped memory for upsample_layer.1']
    #allocation5 [shape = 's32[1]{0}', space=sflag, size = 0x4, scoped, tag = 'scoped memory for upsample_layer.1']
    #allocation6 [shape = 'u8[16384]{0}', space=vmem, size = 0x4000, scoped, tag = 'input window, operand 1, single buffered']
    #allocation7 [shape = 's32[1]{0}', space=sflag, size = 0x4, scoped, tag = 'scoped memory for upsample_layer.1']
    #allocation8 [shape = 'u8[8192]{0}', space=vmem, size = 0x2000, scoped, tag = 'input window, operand 2, single buffered']
    #allocation9 [shape = 'u8[131072]{0}', space=vmem, size = 0x20000, scoped, tag = 'output window, operand 0, single buffered']
    %8 = vsyncpa [#allocation4], 0
    %9 = vsyncpa [#allocation7], 0
    %10 = vsyncpa [#allocation5], 0
    // Predicated region
    $region2: #{upsample_layer.1} parent=1 // pred_check
      _
    $region3: #{upsample_layer.1} parent=1 // pred_check_branch
      %12 = sbr.rel (0) target = $region5
    $region4: #{upsample_layer.1} parent=1 // pred_region
      %s14 = ssub.s32 2048, 2048
      %15 = vsyncadd [#allocation4], %s14
      %s16 = sshll.u32 [#allocation3], 4
      %s17 = int_to_ptr.vmem [resolvable:$true] %s16
      %22 = dma.hbm_to_vmem [thread:$0]  %s0, 2048, %s17, [#allocation4], 128, 128, 8
    $region5: #{upsample_layer.1} parent=1 // pred_fallthru
      _
    // Predicated region
    $region6: #{upsample_layer.1} parent=1 // pred_check
      _
    $region7: #{upsample_layer.1} parent=1 // pred_check_branch
      %24 = sbr.rel (0) target = $region9
    $region8: #{upsample_layer.1} parent=1 // pred_region
      %s26 = ssub.s32 512, 512
      %27 = vsyncadd [#allocation7], %s26
      %s28 = sshll.u32 [#allocation6], 4
      %s29 = int_to_ptr.vmem [resolvable:$true] %s28
      %34 = dma.hbm_to_vmem [thread:$0]  %s1, 512, %s29, [#allocation7], 128, 128, 8
    $region9: #{upsample_layer.1} parent=1 // pred_fallthru
      _
    // Predicated region
    $region10: #{upsample_layer.1} parent=1 // pred_check
      _
    $region11: #{upsample_layer.1} parent=1 // pred_check_branch
      %36 = sbr.rel (0) target = $region13
    $region12: #{upsample_layer.1} parent=1 // pred_region
      %s38 = ssub.s32 256, 256
      %39 = vsyncadd [#allocation7], %s38
      %s40 = sshll.u32 [#allocation8], 4
      %s41 = int_to_ptr.vmem [resolvable:$true] %s40
      %46 = dma.hbm_to_vmem [thread:$0]  %s2, 256, %s41, [#allocation7], 128, 128, 8
    $region13: #{upsample_layer.1} parent=1 // pred_fallthru
      _
    // Predicated region
    $region14: #{upsample_layer.1} parent=1 // pred_check
      _
    $region15: #{upsample_layer.1} parent=1 // pred_check_branch
      %48 = sbr.rel (0) target = $region17
    $region16: #{upsample_layer.1} parent=1 // pred_region
      %49 = dma.done [#allocation4], 2048
    $region17: #{upsample_layer.1} parent=1 // pred_fallthru
      _
    // Predicated region
    $region18: #{upsample_layer.1} parent=1 // pred_check
      _
    $region19: #{upsample_layer.1} parent=1 // pred_check_branch
      %51 = sbr.rel (0) target = $region21
    $region20: #{upsample_layer.1} parent=1 // pred_region
      %52 = dma.done [#allocation7], 512
    $region21: #{upsample_layer.1} parent=1 // pred_fallthru
      _
    // Predicated region
    $region22: #{upsample_layer.1} parent=1 // pred_check
      _
    $region23: #{upsample_layer.1} parent=1 // pred_check_branch
      %54 = sbr.rel (0) target = $region25
    $region24: #{upsample_layer.1} parent=1 // pred_region
      %55 = dma.done [#allocation7], 256
    $region25: #{upsample_layer.1} parent=1 // pred_fallthru
      _
    %v56 = vld [vmem:[#allocation6] sm:$0xff]
    %v57 = vld [vmem:[#allocation6 + $0x8] sm:$0xff]
    %v58 = vld [vmem:[#allocation6 + $0x10] sm:$0xff]
    %v59 = vld [vmem:[#allocation6 + $0x18] sm:$0xff]
    %v60 = vld [vmem:[#allocation8] sm:$0xff]
    %v61 = vld [vmem:[#allocation8 + $0x8] sm:$0xff]
    %v62 = vld [vmem:[#allocation3] sm:$0xff]
    %v63 = vld [vmem:[#allocation3 + $0x8] sm:$0xff]
    %vm64 = vcmask 130048
    %v66 = vsel %vm64, %v56, 0
    %v69 = vsel %vm64, %v57, 0
    %v72 = vsel %vm64, %v58, 0
    %v75 = vsel %vm64, %v59, 0
    %77 = vmatprep.subr.mxu0 0.0
    %78 = vmatpush1.msra.mxu0 0.0
    %79 = vmatprep.subr.mxu0 0.0
    %80 = vmatpush1.msra.mxu0 0.0
    %81 = vmatprep.subr.mxu0 0.0
    %82 = vmatpush1.msra.mxu0 0.0
    %83 = vmatprep.subr.mxu0 0.0
    %84 = vmatpush1.msra.mxu0 0.0
    %85 = vmatprep.subr.mxu0 0.0
    %86 = vmatpush1.msra.mxu0 0.0
    %87 = vmatprep.subr.mxu0 0.0
    %88 = vmatpush1.msra.mxu0 0.0
    %89 = vmatprep.subr.mxu0 0.0
    %90 = vmatpush1.msra.mxu0 0.0
    %91 = vmatprep.subr.mxu0 0.0
    %92 = vmatpush1.msra.mxu0 0.0
    %93 = vmatprep.subr.mxu0 0.0
    %94 = vmatpush1.msra.mxu0 0.0
    %95 = vmatprep.subr.mxu0 0.0
    %96 = vmatpush1.msra.mxu0 0.0
    %97 = vmatprep.subr.mxu0 0.0
    %98 = vmatpush1.msra.mxu0 0.0
    %99 = vmatprep.subr.mxu0 0.0
    %100 = vmatpush1.msra.mxu0 0.0
    %101 = vmatprep.subr.mxu0 0.0
    %102 = vmatpush1.msra.mxu0 0.0
    %103 = vmatprep.subr.mxu0 0.0
    %104 = vmatpush1.msra.mxu0 0.0
    %105 = vmatprep.subr.mxu0 0.0
    %106 = vmatpush1.msra.mxu0 %v63
    %107 = vmatprep.subr.mxu0 0.0
    %108 = vmatpush1.msra.mxu0 %v62
    %109 = vmatprep.subr.mxu0 0.0
    %110 = vmatpush2.msra.mxu0 0.0
    %111 = vmatprep.subr.mxu0 0.0
    %112 = vmatpush2.msra.mxu0 0.0
    %113 = vmatprep.subr.mxu0 0.0
    %114 = vmatpush2.msra.mxu0 0.0
    %115 = vmatprep.subr.mxu0 0.0
    %116 = vmatpush2.msra.mxu0 0.0
    %117 = vmatprep.subr.mxu0 0.0
    %118 = vmatpush2.msra.mxu0 0.0
    %119 = vmatprep.subr.mxu0 0.0
    %120 = vmatpush2.msra.mxu0 0.0
    %121 = vmatprep.subr.mxu0 0.0
    %122 = vmatpush2.msra.mxu0 0.0
    %123 = vmatprep.subr.mxu0 0.0
    %124 = vmatpush2.msra.mxu0 0.0
    %125 = vmatprep.subr.mxu0 0.0
    %126 = vmatpush2.msra.mxu0 0.0
    %127 = vmatprep.subr.mxu0 0.0
    %128 = vmatpush2.msra.mxu0 0.0
    %129 = vmatprep.subr.mxu0 0.0
    %130 = vmatpush2.msra.mxu0 0.0
    %131 = vmatprep.subr.mxu0 0.0
    %132 = vmatpush2.msra.mxu0 0.0
    %133 = vmatprep.subr.mxu0 0.0
    %134 = vmatpush2.msra.mxu0 0.0
    %135 = vmatprep.subr.mxu0 0.0
    %136 = vmatpush2.msra.mxu0 0.0
    %137 = vmatprep.subr.mxu0 0.0
    %138 = vmatpush2.msra.mxu0 0.0
    %139 = vmatprep.subr.mxu0 0.0
    %140 = vmatpush2.msra.mxu0 0.0
    %141 = vmatprep.mubr.f32.mxu0 0.0
    %142 = vmatmul.mubr.f32.gmra.mxu0 %v66
    %v143 = vpop.f32.mrf.mxu0
    %v144 = vadd.f32 0.0, %v143
    %v145 = vpop.f32.mrf.mxu0
    %146 = vmatprep.mubr.f32.mxu0 0.0
    %147 = vmatmul.mubr.f32.gmra.mxu0 %v69
    %v148 = vpop.f32.mrf.mxu0
    %v149 = vadd.f32 0.0, %v148
    %v150 = vpop.f32.mrf.mxu0
    %151 = vmatprep.mubr.f32.mxu0 0.0
    %152 = vmatmul.mubr.f32.gmra.mxu0 %v72
    %v153 = vpop.f32.mrf.mxu0
    %v154 = vadd.f32 0.0, %v153
    %v155 = vpop.f32.mrf.mxu0
    %156 = vmatprep.mubr.f32.mxu0 0.0
    %157 = vmatmul.mubr.f32.gmra.mxu0 %v75
    %v158 = vpop.f32.mrf.mxu0
    %v159 = vadd.f32 0.0, %v158
    %v160 = vpop.f32.mrf.mxu0
    %161 = vdwg.mxu0
    %162 = vst.msk [vmem:[#allocation2] sm:$0xff] %vm64, %v144
    %163 = vst.msk [vmem:[#allocation2 + $0x8] sm:$0xff] %vm64, %v149
    %164 = vst.msk [vmem:[#allocation2 + $0x10] sm:$0xff] %vm64, %v154
    %165 = vst.msk [vmem:[#allocation2 + $0x18] sm:$0xff] %vm64, %v159
    %s166 = scalar_lea.vmem [#allocation3], 16
    %v167 = vld [vmem:[%s166] sm:$0xff]
    %v168 = vld [vmem:[%s166 + $0x8] sm:$0xff]
    %169 = vmatprep.subr.mxu0 0.0
    %170 = vmatpush1.msra.mxu0 0.0
    %171 = vmatprep.subr.mxu0 0.0
    %172 = vmatpush1.msra.mxu0 0.0
    %173 = vmatprep.subr.mxu0 0.0
    %174 = vmatpush1.msra.mxu0 0.0
    %175 = vmatprep.subr.mxu0 0.0
    %176 = vmatpush1.msra.mxu0 0.0
    %177 = vmatprep.subr.mxu0 0.0
    %178 = vmatpush1.msra.mxu0 0.0
    %179 = vmatprep.subr.mxu0 0.0
    %180 = vmatpush1.msra.mxu0 0.0
    %181 = vmatprep.subr.mxu0 0.0
    %182 = vmatpush1.msra.mxu0 0.0
    %183 = vmatprep.subr.mxu0 0.0
    %184 = vmatpush1.msra.mxu0 0.0
    %185 = vmatprep.subr.mxu0 0.0
    %186 = vmatpush1.msra.mxu0 0.0
    %187 = vmatprep.subr.mxu0 0.0
    %188 = vmatpush1.msra.mxu0 0.0
    %189 = vmatprep.subr.mxu0 0.0
    %190 = vmatpush1.msra.mxu0 0.0
    %191 = vmatprep.subr.mxu0 0.0
    %192 = vmatpush1.msra.mxu0 0.0
    %193 = vmatprep.subr.mxu0 0.0
    %194 = vmatpush1.msra.mxu0 0.0
    %195 = vmatprep.subr.mxu0 0.0
    %196 = vmatpush1.msra.mxu0 0.0
    %197 = vmatprep.subr.mxu0 0.0
    %198 = vmatpush1.msra.mxu0 %v168
    %199 = vmatprep.subr.mxu0 0.0
    %200 = vmatpush1.msra.mxu0 %v167
    %201 = vmatprep.subr.mxu0 0.0
    %202 = vmatpush2.msra.mxu0 0.0
    %203 = vmatprep.subr.mxu0 0.0
    %204 = vmatpush2.msra.mxu0 0.0
    %205 = vmatprep.subr.mxu0 0.0
    %206 = vmatpush2.msra.mxu0 0.0
    %207 = vmatprep.subr.mxu0 0.0
    %208 = vmatpush2.msra.mxu0 0.0
    %209 = vmatprep.subr.mxu0 0.0
    %210 = vmatpush2.msra.mxu0 0.0
    %211 = vmatprep.subr.mxu0 0.0
    %212 = vmatpush2.msra.mxu0 0.0
    %213 = vmatprep.subr.mxu0 0.0
    %214 = vmatpush2.msra.mxu0 0.0
    %215 = vmatprep.subr.mxu0 0.0
    %216 = vmatpush2.msra.mxu0 0.0
    %217 = vmatprep.subr.mxu0 0.0
    %218 = vmatpush2.msra.mxu0 0.0
    %219 = vmatprep.subr.mxu0 0.0
    %220 = vmatpush2.msra.mxu0 0.0
    %221 = vmatprep.subr.mxu0 0.0
    %222 = vmatpush2.msra.mxu0 0.0
    %223 = vmatprep.subr.mxu0 0.0
    %224 = vmatpush2.msra.mxu0 0.0
    %225 = vmatprep.subr.mxu0 0.0
    %226 = vmatpush2.msra.mxu0 0.0
    %227 = vmatprep.subr.mxu0 0.0
    %228 = vmatpush2.msra.mxu0 0.0
    %229 = vmatprep.subr.mxu0 0.0
    %230 = vmatpush2.msra.mxu0 0.0
    %231 = vmatprep.subr.mxu0 0.0
    %232 = vmatpush2.msra.mxu0 0.0
    %233 = vmatprep.mubr.f32.mxu0 0.0
    %234 = vmatmul.mubr.f32.gmra.mxu0 %v66
    %v235 = vpop.f32.mrf.mxu0
    %v236 = vadd.f32 0.0, %v235
    %v237 = vpop.f32.mrf.mxu0
    %238 = vmatprep.mubr.f32.mxu0 0.0
    %239 = vmatmul.mubr.f32.gmra.mxu0 %v69
    %v240 = vpop.f32.mrf.mxu0
    %v241 = vadd.f32 0.0, %v240
    %v242 = vpop.f32.mrf.mxu0
    %243 = vmatprep.mubr.f32.mxu0 0.0
    %244 = vmatmul.mubr.f32.gmra.mxu0 %v72
    %v245 = vpop.f32.mrf.mxu0
    %v246 = vadd.f32 0.0, %v245
    %v247 = vpop.f32.mrf.mxu0
    %248 = vmatprep.mubr.f32.mxu0 0.0
    %249 = vmatmul.mubr.f32.gmra.mxu0 %v75
    %v250 = vpop.f32.mrf.mxu0
    %v251 = vadd.f32 0.0, %v250
    %v252 = vpop.f32.mrf.mxu0
    %253 = vdwg.mxu0
    %254 = vst.msk [vmem:[#allocation2 + $0x20] sm:$0xff] %vm64, %v236
    %255 = vst.msk [vmem:[#allocation2 + $0x28] sm:$0xff] %vm64, %v241
    %256 = vst.msk [vmem:[#allocation2 + $0x30] sm:$0xff] %vm64, %v246
    %257 = vst.msk [vmem:[#allocation2 + $0x38] sm:$0xff] %vm64, %v251
    %s258 = scalar_lea.vmem [#allocation3], 32
    %v259 = vld [vmem:[%s258] sm:$0xff]
    %v260 = vld [vmem:[%s258 + $0x8] sm:$0xff]
    %261 = vmatprep.subr.mxu0 0.0
    %262 = vmatpush1.msra.mxu0 0.0
    %263 = vmatprep.subr.mxu0 0.0
    %264 = vmatpush1.msra.mxu0 0.0
    %265 = vmatprep.subr.mxu0 0.0
    %266 = vmatpush1.msra.mxu0 0.0
    %267 = vmatprep.subr.mxu0 0.0
    %268 = vmatpush1.msra.mxu0 0.0
    %269 = vmatprep.subr.mxu0 0.0
    %270 = vmatpush1.msra.mxu0 0.0
    %271 = vmatprep.subr.mxu0 0.0
    %272 = vmatpush1.msra.mxu0 0.0
    %273 = vmatprep.subr.mxu0 0.0
    %274 = vmatpush1.msra.mxu0 0.0
    %275 = vmatprep.subr.mxu0 0.0
    %276 = vmatpush1.msra.mxu0 0.0
    %277 = vmatprep.subr.mxu0 0.0
    %278 = vmatpush1.msra.mxu0 0.0
    %279 = vmatprep.subr.mxu0 0.0
    %280 = vmatpush1.msra.mxu0 0.0
    %281 = vmatprep.subr.mxu0 0.0
    %282 = vmatpush1.msra.mxu0 0.0
    %283 = vmatprep.subr.mxu0 0.0
    %284 = vmatpush1.msra.mxu0 0.0
    %285 = vmatprep.subr.mxu0 0.0
    %286 = vmatpush1.msra.mxu0 0.0
    %287 = vmatprep.subr.mxu0 0.0
    %288 = vmatpush1.msra.mxu0 0.0
    %289 = vmatprep.subr.mxu0 0.0
    %290 = vmatpush1.msra.mxu0 %v260
    %291 = vmatprep.subr.mxu0 0.0
    %292 = vmatpush1.msra.mxu0 %v259
    %293 = vmatprep.subr.mxu0 0.0
    %294 = vmatpush2.msra.mxu0 0.0
    %295 = vmatprep.subr.mxu0 0.0
    %296 = vmatpush2.msra.mxu0 0.0
    %297 = vmatprep.subr.mxu0 0.0
    %298 = vmatpush2.msra.mxu0 0.0
    %299 = vmatprep.subr.mxu0 0.0
    %300 = vmatpush2.msra.mxu0 0.0
    %301 = vmatprep.subr.mxu0 0.0
    %302 = vmatpush2.msra.mxu0 0.0
    %303 = vmatprep.subr.mxu0 0.0
    %304 = vmatpush2.msra.mxu0 0.0
    %305 = vmatprep.subr.mxu0 0.0
    %306 = vmatpush2.msra.mxu0 0.0
    %307 = vmatprep.subr.mxu0 0.0
    %308 = vmatpush2.msra.mxu0 0.0
    %309 = vmatprep.subr.mxu0 0.0
    %310 = vmatpush2.msra.mxu0 0.0
    %311 = vmatprep.subr.mxu0 0.0
    %312 = vmatpush2.msra.mxu0 0.0
    %313 = vmatprep.subr.mxu0 0.0
    %314 = vmatpush2.msra.mxu0 0.0
    %315 = vmatprep.subr.mxu0 0.0
    %316 = vmatpush2.msra.mxu0 0.0
    %317 = vmatprep.subr.mxu0 0.0
    %318 = vmatpush2.msra.mxu0 0.0
    %319 = vmatprep.subr.mxu0 0.0
    %320 = vmatpush2.msra.mxu0 0.0
    %321 = vmatprep.subr.mxu0 0.0
    %322 = vmatpush2.msra.mxu0 0.0
    %323 = vmatprep.subr.mxu0 0.0
    %324 = vmatpush2.msra.mxu0 0.0
    %325 = vmatprep.mubr.f32.mxu0 0.0
    %326 = vmatmul.mubr.f32.gmra.mxu0 %v66
    %v327 = vpop.f32.mrf.mxu0
    %v328 = vadd.f32 0.0, %v327
    %v329 = vpop.f32.mrf.mxu0
    %330 = vmatprep.mubr.f32.mxu0 0.0
    %331 = vmatmul.mubr.f32.gmra.mxu0 %v69
    %v332 = vpop.f32.mrf.mxu0
    %v333 = vadd.f32 0.0, %v332
    %v334 = vpop.f32.mrf.mxu0
    %335 = vmatprep.mubr.f32.mxu0 0.0
    %336 = vmatmul.mubr.f32.gmra.mxu0 %v72
    %v337 = vpop.f32.mrf.mxu0
    %v338 = vadd.f32 0.0, %v337
    %v339 = vpop.f32.mrf.mxu0
    %340 = vmatprep.mubr.f32.mxu0 0.0
    %341 = vmatmul.mubr.f32.gmra.mxu0 %v75
    %v342 = vpop.f32.mrf.mxu0
    %v343 = vadd.f32 0.0, %v342
    %v344 = vpop.f32.mrf.mxu0
    %345 = vdwg.mxu0
    %346 = vst.msk [vmem:[#allocation2 + $0x40] sm:$0xff] %vm64, %v328
    %347 = vst.msk [vmem:[#allocation2 + $0x48] sm:$0xff] %vm64, %v333
    %348 = vst.msk [vmem:[#allocation2 + $0x50] sm:$0xff] %vm64, %v338
    %349 = vst.msk [vmem:[#allocation2 + $0x58] sm:$0xff] %vm64, %v343
    %s350 = scalar_lea.vmem [#allocation3], 48
    %v351 = vld [vmem:[%s350] sm:$0xff]
    %v352 = vld [vmem:[%s350 + $0x8] sm:$0xff]
    %353 = vmatprep.subr.mxu0 0.0
    %354 = vmatpush1.msra.mxu0 0.0
    %355 = vmatprep.subr.mxu0 0.0
    %356 = vmatpush1.msra.mxu0 0.0
    %357 = vmatprep.subr.mxu0 0.0
    %358 = vmatpush1.msra.mxu0 0.0
    %359 = vmatprep.subr.mxu0 0.0
    %360 = vmatpush1.msra.mxu0 0.0
    %361 = vmatprep.subr.mxu0 0.0
    %362 = vmatpush1.msra.mxu0 0.0
    %363 = vmatprep.subr.mxu0 0.0
    %364 = vmatpush1.msra.mxu0 0.0
    %365 = vmatprep.subr.mxu0 0.0
    %366 = vmatpush1.msra.mxu0 0.0
    %367 = vmatprep.subr.mxu0 0.0
    %368 = vmatpush1.msra.mxu0 0.0
    %369 = vmatprep.subr.mxu0 0.0
    %370 = vmatpush1.msra.mxu0 0.0
    %371 = vmatprep.subr.mxu0 0.0
    %372 = vmatpush1.msra.mxu0 0.0
    %373 = vmatprep.subr.mxu0 0.0
    %374 = vmatpush1.msra.mxu0 0.0
    %375 = vmatprep.subr.mxu0 0.0
    %376 = vmatpush1.msra.mxu0 0.0
    %377 = vmatprep.subr.mxu0 0.0
    %378 = vmatpush1.msra.mxu0 0.0
    %379 = vmatprep.subr.mxu0 0.0
    %380 = vmatpush1.msra.mxu0 0.0
    %381 = vmatprep.subr.mxu0 0.0
    %382 = vmatpush1.msra.mxu0 %v352
    %383 = vmatprep.subr.mxu0 0.0
    %384 = vmatpush1.msra.mxu0 %v351
    %385 = vmatprep.subr.mxu0 0.0
    %386 = vmatpush2.msra.mxu0 0.0
    %387 = vmatprep.subr.mxu0 0.0
    %388 = vmatpush2.msra.mxu0 0.0
    %389 = vmatprep.subr.mxu0 0.0
    %390 = vmatpush2.msra.mxu0 0.0
    %391 = vmatprep.subr.mxu0 0.0
    %392 = vmatpush2.msra.mxu0 0.0
    %393 = vmatprep.subr.mxu0 0.0
    %394 = vmatpush2.msra.mxu0 0.0
    %395 = vmatprep.subr.mxu0 0.0
    %396 = vmatpush2.msra.mxu0 0.0
    %397 = vmatprep.subr.mxu0 0.0
    %398 = vmatpush2.msra.mxu0 0.0
    %399 = vmatprep.subr.mxu0 0.0
    %400 = vmatpush2.msra.mxu0 0.0
    %401 = vmatprep.subr.mxu0 0.0
    %402 = vmatpush2.msra.mxu0 0.0
    %403 = vmatprep.subr.mxu0 0.0
    %404 = vmatpush2.msra.mxu0 0.0
    %405 = vmatprep.subr.mxu0 0.0
    %406 = vmatpush2.msra.mxu0 0.0
    %407 = vmatprep.subr.mxu0 0.0
    %408 = vmatpush2.msra.mxu0 0.0
    %409 = vmatprep.subr.mxu0 0.0
    %410 = vmatpush2.msra.mxu0 0.0
    %411 = vmatprep.subr.mxu0 0.0
    %412 = vmatpush2.msra.mxu0 0.0
    %413 = vmatprep.subr.mxu0 0.0
    %414 = vmatpush2.msra.mxu0 0.0
    %415 = vmatprep.subr.mxu0 0.0
    %416 = vmatpush2.msra.mxu0 0.0
    %417 = vmatprep.mubr.f32.mxu0 0.0
    %418 = vmatmul.mubr.f32.gmra.mxu0 %v66
    %v419 = vpop.f32.mrf.mxu0
    %v420 = vadd.f32 0.0, %v419
    %v421 = vpop.f32.mrf.mxu0
    %422 = vmatprep.mubr.f32.mxu0 0.0
    %423 = vmatmul.mubr.f32.gmra.mxu0 %v69
    %v424 = vpop.f32.mrf.mxu0
    %v425 = vadd.f32 0.0, %v424
    %v426 = vpop.f32.mrf.mxu0
    %427 = vmatprep.mubr.f32.mxu0 0.0
    %428 = vmatmul.mubr.f32.gmra.mxu0 %v72
    %v429 = vpop.f32.mrf.mxu0
    %v430 = vadd.f32 0.0, %v429
    %v431 = vpop.f32.mrf.mxu0
    %432 = vmatprep.mubr.f32.mxu0 0.0
    %433 = vmatmul.mubr.f32.gmra.mxu0 %v75
    %v434 = vpop.f32.mrf.mxu0
    %v435 = vadd.f32 0.0, %v434
    %v436 = vpop.f32.mrf.mxu0
    %437 = vdwg.mxu0
    %438 = vst.msk [vmem:[#allocation2 + $0x60] sm:$0xff] %vm64, %v420
    %439 = vst.msk [vmem:[#allocation2 + $0x68] sm:$0xff] %vm64, %v425
    %440 = vst.msk [vmem:[#allocation2 + $0x70] sm:$0xff] %vm64, %v430
    %441 = vst.msk [vmem:[#allocation2 + $0x78] sm:$0xff] %vm64, %v435
    %s442 = scalar_lea.vmem [#allocation3], 64
    %v443 = vld [vmem:[%s442] sm:$0xff]
    %v444 = vld [vmem:[%s442 + $0x8] sm:$0xff]
    %445 = vmatprep.subr.mxu0 0.0
    %446 = vmatpush1.msra.mxu0 0.0
    %447 = vmatprep.subr.mxu0 0.0
    %448 = vmatpush1.msra.mxu0 0.0
    %449 = vmatprep.subr.mxu0 0.0
    %450 = vmatpush1.msra.mxu0 0.0
    %451 = vmatprep.subr.mxu0 0.0
    %452 = vmatpush1.msra.mxu0 0.0
    %453 = vmatprep.subr.mxu0 0.0
    %454 = vmatpush1.msra.mxu0 0.0
    %455 = vmatprep.subr.mxu0 0.0
    %456 = vmatpush1.msra.mxu0 0.0
    %457 = vmatprep.subr.mxu0 0.0
    %458 = vmatpush1.msra.mxu0 0.0
    %459 = vmatprep.subr.mxu0 0.0
    %460 = vmatpush1.msra.mxu0 0.0
    %461 = vmatprep.subr.mxu0 0.0
    %462 = vmatpush1.msra.mxu0 0.0
    %463 = vmatprep.subr.mxu0 0.0
    %464 = vmatpush1.msra.mxu0 0.0
    %465 = vmatprep.subr.mxu0 0.0
    %466 = vmatpush1.msra.mxu0 0.0
    %467 = vmatprep.subr.mxu0 0.0
    %468 = vmatpush1.msra.mxu0 0.0
    %469 = vmatprep.subr.mxu0 0.0
    %470 = vmatpush1.msra.mxu0 0.0
    %471 = vmatprep.subr.mxu0 0.0
    %472 = vmatpush1.msra.mxu0 0.0
    %473 = vmatprep.subr.mxu0 0.0
    %474 = vmatpush1.msra.mxu0 %v444
    %475 = vmatprep.subr.mxu0 0.0
    %476 = vmatpush1.msra.mxu0 %v443
    %477 = vmatprep.subr.mxu0 0.0
    %478 = vmatpush2.msra.mxu0 0.0
    %479 = vmatprep.subr.mxu0 0.0
    %480 = vmatpush2.msra.mxu0 0.0
    %481 = vmatprep.subr.mxu0 0.0
    %482 = vmatpush2.msra.mxu0 0.0
    %483 = vmatprep.subr.mxu0 0.0
    %484 = vmatpush2.msra.mxu0 0.0
    %485 = vmatprep.subr.mxu0 0.0
    %486 = vmatpush2.msra.mxu0 0.0
    %487 = vmatprep.subr.mxu0 0.0
    %488 = vmatpush2.msra.mxu0 0.0
    %489 = vmatprep.subr.mxu0 0.0
    %490 = vmatpush2.msra.mxu0 0.0
    %491 = vmatprep.subr.mxu0 0.0
    %492 = vmatpush2.msra.mxu0 0.0
    %493 = vmatprep.subr.mxu0 0.0
    %494 = vmatpush2.msra.mxu0 0.0
    %495 = vmatprep.subr.mxu0 0.0
    %496 = vmatpush2.msra.mxu0 0.0
    %497 = vmatprep.subr.mxu0 0.0
    %498 = vmatpush2.msra.mxu0 0.0
    %499 = vmatprep.subr.mxu0 0.0
    %500 = vmatpush2.msra.mxu0 0.0
    %501 = vmatprep.subr.mxu0 0.0
    %502 = vmatpush2.msra.mxu0 0.0
    %503 = vmatprep.subr.mxu0 0.0
    %504 = vmatpush2.msra.mxu0 0.0
    %505 = vmatprep.subr.mxu0 0.0
    %506 = vmatpush2.msra.mxu0 0.0
    %507 = vmatprep.subr.mxu0 0.0
    %508 = vmatpush2.msra.mxu0 0.0
    %509 = vmatprep.mubr.f32.mxu0 0.0
    %510 = vmatmul.mubr.f32.gmra.mxu0 %v66
    %v511 = vpop.f32.mrf.mxu0
    %v512 = vadd.f32 0.0, %v511
    %v513 = vpop.f32.mrf.mxu0
    %514 = vmatprep.mubr.f32.mxu0 0.0
    %515 = vmatmul.mubr.f32.gmra.mxu0 %v69
    %v516 = vpop.f32.mrf.mxu0
    %v517 = vadd.f32 0.0, %v516
    %v518 = vpop.f32.mrf.mxu0
    %519 = vmatprep.mubr.f32.mxu0 0.0
    %520 = vmatmul.mubr.f32.gmra.mxu0 %v72
    %v521 = vpop.f32.mrf.mxu0
    %v522 = vadd.f32 0.0, %v521
    %v523 = vpop.f32.mrf.mxu0
    %524 = vmatprep.mubr.f32.mxu0 0.0
    %525 = vmatmul.mubr.f32.gmra.mxu0 %v75
    %v526 = vpop.f32.mrf.mxu0
    %v527 = vadd.f32 0.0, %v526
    %v528 = vpop.f32.mrf.mxu0
    %529 = vdwg.mxu0
    %530 = vst.msk [vmem:[#allocation2 + $0x80] sm:$0xff] %vm64, %v512
    %531 = vst.msk [vmem:[#allocation2 + $0x88] sm:$0xff] %vm64, %v517
    %532 = vst.msk [vmem:[#allocation2 + $0x90] sm:$0xff] %vm64, %v522
    %533 = vst.msk [vmem:[#allocation2 + $0x98] sm:$0xff] %vm64, %v527
    %s534 = scalar_lea.vmem [#allocation3], 80
    %v535 = vld [vmem:[%s534] sm:$0xff]
    %v536 = vld [vmem:[%s534 + $0x8] sm:$0xff]
    %537 = vmatprep.subr.mxu0 0.0
    %538 = vmatpush1.msra.mxu0 0.0
    %539 = vmatprep.subr.mxu0 0.0
    %540 = vmatpush1.msra.mxu0 0.0
    %541 = vmatprep.subr.mxu0 0.0
    %542 = vmatpush1.msra.mxu0 0.0
    %543 = vmatprep.subr.mxu0 0.0
    %544 = vmatpush1.msra.mxu0 0.0
    %545 = vmatprep.subr.mxu0 0.0
    %546 = vmatpush1.msra.mxu0 0.0
    %547 = vmatprep.subr.mxu0 0.0
    %548 = vmatpush1.msra.mxu0 0.0
    %549 = vmatprep.subr.mxu0 0.0
    %550 = vmatpush1.msra.mxu0 0.0
    %551 = vmatprep.subr.mxu0 0.0
    %552 = vmatpush1.msra.mxu0 0.0
    %553 = vmatprep.subr.mxu0 0.0
    %554 = vmatpush1.msra.mxu0 0.0
    %555 = vmatprep.subr.mxu0 0.0
    %556 = vmatpush1.msra.mxu0 0.0
    %557 = vmatprep.subr.mxu0 0.0
    %558 = vmatpush1.msra.mxu0 0.0
    %559 = vmatprep.subr.mxu0 0.0
    %560 = vmatpush1.msra.mxu0 0.0
    %561 = vmatprep.subr.mxu0 0.0
    %562 = vmatpush1.msra.mxu0 0.0
    %563 = vmatprep.subr.mxu0 0.0
    %564 = vmatpush1.msra.mxu0 0.0
    %565 = vmatprep.subr.mxu0 0.0
    %566 = vmatpush1.msra.mxu0 %v536
    %567 = vmatprep.subr.mxu0 0.0
    %568 = vmatpush1.msra.mxu0 %v535
    %569 = vmatprep.subr.mxu0 0.0
    %570 = vmatpush2.msra.mxu0 0.0
    %571 = vmatprep.subr.mxu0 0.0
    %572 = vmatpush2.msra.mxu0 0.0
    %573 = vmatprep.subr.mxu0 0.0
    %574 = vmatpush2.msra.mxu0 0.0
    %575 = vmatprep.subr.mxu0 0.0
    %576 = vmatpush2.msra.mxu0 0.0
    %577 = vmatprep.subr.mxu0 0.0
    %578 = vmatpush2.msra.mxu0 0.0
    %579 = vmatprep.subr.mxu0 0.0
    %580 = vmatpush2.msra.mxu0 0.0
    %581 = vmatprep.subr.mxu0 0.0
    %582 = vmatpush2.msra.mxu0 0.0
    %583 = vmatprep.subr.mxu0 0.0
    %584 = vmatpush2.msra.mxu0 0.0
    %585 = vmatprep.subr.mxu0 0.0
    %586 = vmatpush2.msra.mxu0 0.0
    %587 = vmatprep.subr.mxu0 0.0
    %588 = vmatpush2.msra.mxu0 0.0
    %589 = vmatprep.subr.mxu0 0.0
    %590 = vmatpush2.msra.mxu0 0.0
    %591 = vmatprep.subr.mxu0 0.0
    %592 = vmatpush2.msra.mxu0 0.0
    %593 = vmatprep.subr.mxu0 0.0
    %594 = vmatpush2.msra.mxu0 0.0
    %595 = vmatprep.subr.mxu0 0.0
    %596 = vmatpush2.msra.mxu0 0.0
    %597 = vmatprep.subr.mxu0 0.0
    %598 = vmatpush2.msra.mxu0 0.0
    %599 = vmatprep.subr.mxu0 0.0
    %600 = vmatpush2.msra.mxu0 0.0
    %601 = vmatprep.mubr.f32.mxu0 0.0
    %602 = vmatmul.mubr.f32.gmra.mxu0 %v66
    %v603 = vpop.f32.mrf.mxu0
    %v604 = vadd.f32 0.0, %v603
    %v605 = vpop.f32.mrf.mxu0
    %606 = vmatprep.mubr.f32.mxu0 0.0
    %607 = vmatmul.mubr.f32.gmra.mxu0 %v69
    %v608 = vpop.f32.mrf.mxu0
    %v609 = vadd.f32 0.0, %v608
    %v610 = vpop.f32.mrf.mxu0
    %611 = vmatprep.mubr.f32.mxu0 0.0
    %612 = vmatmul.mubr.f32.gmra.mxu0 %v72
    %v613 = vpop.f32.mrf.mxu0
    %v614 = vadd.f32 0.0, %v613
    %v615 = vpop.f32.mrf.mxu0
    %616 = vmatprep.mubr.f32.mxu0 0.0
    %617 = vmatmul.mubr.f32.gmra.mxu0 %v75
    %v618 = vpop.f32.mrf.mxu0
    %v619 = vadd.f32 0.0, %v618
    %v620 = vpop.f32.mrf.mxu0
    %621 = vdwg.mxu0
    %622 = vst.msk [vmem:[#allocation2 + $0xa0] sm:$0xff] %vm64, %v604
    %623 = vst.msk [vmem:[#allocation2 + $0xa8] sm:$0xff] %vm64, %v609
    %624 = vst.msk [vmem:[#allocation2 + $0xb0] sm:$0xff] %vm64, %v614
    %625 = vst.msk [vmem:[#allocation2 + $0xb8] sm:$0xff] %vm64, %v619
    %s626 = scalar_lea.vmem [#allocation3], 96
    %v627 = vld [vmem:[%s626] sm:$0xff]
    %v628 = vld [vmem:[%s626 + $0x8] sm:$0xff]
    %629 = vmatprep.subr.mxu0 0.0
    %630 = vmatpush1.msra.mxu0 0.0
    %631 = vmatprep.subr.mxu0 0.0
    %632 = vmatpush1.msra.mxu0 0.0
    %633 = vmatprep.subr.mxu0 0.0
    %634 = vmatpush1.msra.mxu0 0.0
    %635 = vmatprep.subr.mxu0 0.0
    %636 = vmatpush1.msra.mxu0 0.0
    %637 = vmatprep.subr.mxu0 0.0
    %638 = vmatpush1.msra.mxu0 0.0
    %639 = vmatprep.subr.mxu0 0.0
    %640 = vmatpush1.msra.mxu0 0.0
    %641 = vmatprep.subr.mxu0 0.0
    %642 = vmatpush1.msra.mxu0 0.0
    %643 = vmatprep.subr.mxu0 0.0
    %644 = vmatpush1.msra.mxu0 0.0
    %645 = vmatprep.subr.mxu0 0.0
    %646 = vmatpush1.msra.mxu0 0.0
    %647 = vmatprep.subr.mxu0 0.0
    %648 = vmatpush1.msra.mxu0 0.0
    %649 = vmatprep.subr.mxu0 0.0
    %650 = vmatpush1.msra.mxu0 0.0
    %651 = vmatprep.subr.mxu0 0.0
    %652 = vmatpush1.msra.mxu0 0.0
    %653 = vmatprep.subr.mxu0 0.0
    %654 = vmatpush1.msra.mxu0 0.0
    %655 = vmatprep.subr.mxu0 0.0
    %656 = vmatpush1.msra.mxu0 0.0
    %657 = vmatprep.subr.mxu0 0.0
    %658 = vmatpush1.msra.mxu0 %v628
    %659 = vmatprep.subr.mxu0 0.0
    %660 = vmatpush1.msra.mxu0 %v627
    %661 = vmatprep.subr.mxu0 0.0
    %662 = vmatpush2.msra.mxu0 0.0
    %663 = vmatprep.subr.mxu0 0.0
    %664 = vmatpush2.msra.mxu0 0.0
    %665 = vmatprep.subr.mxu0 0.0
    %666 = vmatpush2.msra.mxu0 0.0
    %667 = vmatprep.subr.mxu0 0.0
    %668 = vmatpush2.msra.mxu0 0.0
    %669 = vmatprep.subr.mxu0 0.0
    %670 = vmatpush2.msra.mxu0 0.0
    %671 = vmatprep.subr.mxu0 0.0
    %672 = vmatpush2.msra.mxu0 0.0
    %673 = vmatprep.subr.mxu0 0.0
    %674 = vmatpush2.msra.mxu0 0.0
    %675 = vmatprep.subr.mxu0 0.0
    %676 = vmatpush2.msra.mxu0 0.0
    %677 = vmatprep.subr.mxu0 0.0
    %678 = vmatpush2.msra.mxu0 0.0
    %679 = vmatprep.subr.mxu0 0.0
    %680 = vmatpush2.msra.mxu0 0.0
    %681 = vmatprep.subr.mxu0 0.0
    %682 = vmatpush2.msra.mxu0 0.0
    %683 = vmatprep.subr.mxu0 0.0
    %684 = vmatpush2.msra.mxu0 0.0
    %685 = vmatprep.subr.mxu0 0.0
    %686 = vmatpush2.msra.mxu0 0.0
    %687 = vmatprep.subr.mxu0 0.0
    %688 = vmatpush2.msra.mxu0 0.0
    %689 = vmatprep.subr.mxu0 0.0
    %690 = vmatpush2.msra.mxu0 0.0
    %691 = vmatprep.subr.mxu0 0.0
    %692 = vmatpush2.msra.mxu0 0.0
    %693 = vmatprep.mubr.f32.mxu0 0.0
    %694 = vmatmul.mubr.f32.gmra.mxu0 %v66
    %v695 = vpop.f32.mrf.mxu0
    %v696 = vadd.f32 0.0, %v695
    %v697 = vpop.f32.mrf.mxu0
    %698 = vmatprep.mubr.f32.mxu0 0.0
    %699 = vmatmul.mubr.f32.gmra.mxu0 %v69
    %v700 = vpop.f32.mrf.mxu0
    %v701 = vadd.f32 0.0, %v700
    %v702 = vpop.f32.mrf.mxu0
    %703 = vmatprep.mubr.f32.mxu0 0.0
    %704 = vmatmul.mubr.f32.gmra.mxu0 %v72
    %v705 = vpop.f32.mrf.mxu0
    %v706 = vadd.f32 0.0, %v705
    %v707 = vpop.f32.mrf.mxu0
    %708 = vmatprep.mubr.f32.mxu0 0.0
    %709 = vmatmul.mubr.f32.gmra.mxu0 %v75
    %v710 = vpop.f32.mrf.mxu0
    %v711 = vadd.f32 0.0, %v710
    %v712 = vpop.f32.mrf.mxu0
    %713 = vdwg.mxu0
    %714 = vst.msk [vmem:[#allocation2 + $0xc0] sm:$0xff] %vm64, %v696
    %715 = vst.msk [vmem:[#allocation2 + $0xc8] sm:$0xff] %vm64, %v701
    %716 = vst.msk [vmem:[#allocation2 + $0xd0] sm:$0xff] %vm64, %v706
    %717 = vst.msk [vmem:[#allocation2 + $0xd8] sm:$0xff] %vm64, %v711
    %s718 = scalar_lea.vmem [#allocation3], 112
    %v719 = vld [vmem:[%s718] sm:$0xff]
    %v720 = vld [vmem:[%s718 + $0x8] sm:$0xff]
    %721 = vmatprep.subr.mxu0 0.0
    %722 = vmatpush1.msra.mxu0 0.0
    %723 = vmatprep.subr.mxu0 0.0
    %724 = vmatpush1.msra.mxu0 0.0
    %725 = vmatprep.subr.mxu0 0.0
    %726 = vmatpush1.msra.mxu0 0.0
    %727 = vmatprep.subr.mxu0 0.0
    %728 = vmatpush1.msra.mxu0 0.0
    %729 = vmatprep.subr.mxu0 0.0
    %730 = vmatpush1.msra.mxu0 0.0
    %731 = vmatprep.subr.mxu0 0.0
    %732 = vmatpush1.msra.mxu0 0.0
    %733 = vmatprep.subr.mxu0 0.0
    %734 = vmatpush1.msra.mxu0 0.0
    %735 = vmatprep.subr.mxu0 0.0
    %736 = vmatpush1.msra.mxu0 0.0
    %737 = vmatprep.subr.mxu0 0.0
    %738 = vmatpush1.msra.mxu0 0.0
    %739 = vmatprep.subr.mxu0 0.0
    %740 = vmatpush1.msra.mxu0 0.0
    %741 = vmatprep.subr.mxu0 0.0
    %742 = vmatpush1.msra.mxu0 0.0
    %743 = vmatprep.subr.mxu0 0.0
    %744 = vmatpush1.msra.mxu0 0.0
    %745 = vmatprep.subr.mxu0 0.0
    %746 = vmatpush1.msra.mxu0 0.0
    %747 = vmatprep.subr.mxu0 0.0
    %748 = vmatpush1.msra.mxu0 0.0
    %749 = vmatprep.subr.mxu0 0.0
    %750 = vmatpush1.msra.mxu0 %v720
    %751 = vmatprep.subr.mxu0 0.0
    %752 = vmatpush1.msra.mxu0 %v719
    %753 = vmatprep.subr.mxu0 0.0
    %754 = vmatpush2.msra.mxu0 0.0
    %755 = vmatprep.subr.mxu0 0.0
    %756 = vmatpush2.msra.mxu0 0.0
    %757 = vmatprep.subr.mxu0 0.0
    %758 = vmatpush2.msra.mxu0 0.0
    %759 = vmatprep.subr.mxu0 0.0
    %760 = vmatpush2.msra.mxu0 0.0
    %761 = vmatprep.subr.mxu0 0.0
    %762 = vmatpush2.msra.mxu0 0.0
    %763 = vmatprep.subr.mxu0 0.0
    %764 = vmatpush2.msra.mxu0 0.0
    %765 = vmatprep.subr.mxu0 0.0
    %766 = vmatpush2.msra.mxu0 0.0
    %767 = vmatprep.subr.mxu0 0.0
    %768 = vmatpush2.msra.mxu0 0.0
    %769 = vmatprep.subr.mxu0 0.0
    %770 = vmatpush2.msra.mxu0 0.0
    %771 = vmatprep.subr.mxu0 0.0
    %772 = vmatpush2.msra.mxu0 0.0
    %773 = vmatprep.subr.mxu0 0.0
    %774 = vmatpush2.msra.mxu0 0.0
    %775 = vmatprep.subr.mxu0 0.0
    %776 = vmatpush2.msra.mxu0 0.0
    %777 = vmatprep.subr.mxu0 0.0
    %778 = vmatpush2.msra.mxu0 0.0
    %779 = vmatprep.subr.mxu0 0.0
    %780 = vmatpush2.msra.mxu0 0.0
    %781 = vmatprep.subr.mxu0 0.0
    %782 = vmatpush2.msra.mxu0 0.0
    %783 = vmatprep.subr.mxu0 0.0
    %784 = vmatpush2.msra.mxu0 0.0
    %785 = vmatprep.mubr.f32.mxu0 0.0
    %786 = vmatmul.mubr.f32.gmra.mxu0 %v66
    %v787 = vpop.f32.mrf.mxu0
    %v788 = vadd.f32 0.0, %v787
    %v789 = vpop.f32.mrf.mxu0
    %790 = vmatprep.mubr.f32.mxu0 0.0
    %791 = vmatmul.mubr.f32.gmra.mxu0 %v69
    %v792 = vpop.f32.mrf.mxu0
    %v793 = vadd.f32 0.0, %v792
    %v794 = vpop.f32.mrf.mxu0
    %795 = vmatprep.mubr.f32.mxu0 0.0
    %796 = vmatmul.mubr.f32.gmra.mxu0 %v72
    %v797 = vpop.f32.mrf.mxu0
    %v798 = vadd.f32 0.0, %v797
    %v799 = vpop.f32.mrf.mxu0
    %800 = vmatprep.mubr.f32.mxu0 0.0
    %801 = vmatmul.mubr.f32.gmra.mxu0 %v75
    %v802 = vpop.f32.mrf.mxu0
    %v803 = vadd.f32 0.0, %v802
    %v804 = vpop.f32.mrf.mxu0
    %805 = vdwg.mxu0
    %806 = vst.msk [vmem:[#allocation2 + $0xe0] sm:$0xff] %vm64, %v788
    %807 = vst.msk [vmem:[#allocation2 + $0xe8] sm:$0xff] %vm64, %v793
    %808 = vst.msk [vmem:[#allocation2 + $0xf0] sm:$0xff] %vm64, %v798
    %809 = vst.msk [vmem:[#allocation2 + $0xf8] sm:$0xff] %vm64, %v803
    %v810 = vld [vmem:[#allocation2] sm:$0xff]
    %v811 = vld [vmem:[#allocation2 + $0x8] sm:$0xff]
    %v812 = vld [vmem:[#allocation2 + $0x10] sm:$0xff]
    %v813 = vld [vmem:[#allocation2 + $0x18] sm:$0xff]
    %v814 = vld [vmem:[#allocation2 + $0x20] sm:$0xff]
    %v815 = vld [vmem:[#allocation2 + $0x28] sm:$0xff]
    %v816 = vld [vmem:[#allocation2 + $0x30] sm:$0xff]
    %v817 = vld [vmem:[#allocation2 + $0x38] sm:$0xff]
    %v818 = vld [vmem:[#allocation2 + $0x40] sm:$0xff]
    %v819 = vld [vmem:[#allocation2 + $0x48] sm:$0xff]
    %v820 = vld [vmem:[#allocation2 + $0x50] sm:$0xff]
    %v821 = vld [vmem:[#allocation2 + $0x58] sm:$0xff]
    %v822 = vld [vmem:[#allocation2 + $0x60] sm:$0xff]
    %v823 = vld [vmem:[#allocation2 + $0x68] sm:$0xff]
    %v824 = vld [vmem:[#allocation2 + $0x70] sm:$0xff]
    %v825 = vld [vmem:[#allocation2 + $0x78] sm:$0xff]
    %v826 = vld [vmem:[#allocation2 + $0x80] sm:$0xff]
    %v827 = vld [vmem:[#allocation2 + $0x88] sm:$0xff]
    %v828 = vld [vmem:[#allocation2 + $0x90] sm:$0xff]
    %v829 = vld [vmem:[#allocation2 + $0x98] sm:$0xff]
    %v830 = vld [vmem:[#allocation2 + $0xa0] sm:$0xff]
    %v831 = vld [vmem:[#allocation2 + $0xa8] sm:$0xff]
    %v832 = vld [vmem:[#allocation2 + $0xb0] sm:$0xff]
    %v833 = vld [vmem:[#allocation2 + $0xb8] sm:$0xff]
    %v834 = vld [vmem:[#allocation2 + $0xc0] sm:$0xff]
    %v835 = vld [vmem:[#allocation2 + $0xc8] sm:$0xff]
    %v836 = vld [vmem:[#allocation2 + $0xd0] sm:$0xff]
    %v837 = vld [vmem:[#allocation2 + $0xd8] sm:$0xff]
    %v838 = vld [vmem:[#allocation2 + $0xe0] sm:$0xff]
    %v839 = vld [vmem:[#allocation2 + $0xe8] sm:$0xff]
    %v840 = vld [vmem:[#allocation2 + $0xf0] sm:$0xff]
    %v841 = vld [vmem:[#allocation2 + $0xf8] sm:$0xff]
    %v843 = vsel %vm64, %v810, 0
    %v846 = vsel %vm64, %v811, 0
    %v849 = vsel %vm64, %v812, 0
    %v852 = vsel %vm64, %v813, 0
    %v855 = vsel %vm64, %v814, 0
    %v858 = vsel %vm64, %v815, 0
    %v861 = vsel %vm64, %v816, 0
    %v864 = vsel %vm64, %v817, 0
    %v867 = vsel %vm64, %v818, 0
    %v870 = vsel %vm64, %v819, 0
    %v873 = vsel %vm64, %v820, 0
    %v876 = vsel %vm64, %v821, 0
    %v879 = vsel %vm64, %v822, 0
    %v882 = vsel %vm64, %v823, 0
    %v885 = vsel %vm64, %v824, 0
    %v888 = vsel %vm64, %v825, 0
    %v891 = vsel %vm64, %v826, 0
    %v894 = vsel %vm64, %v827, 0
    %v897 = vsel %vm64, %v828, 0
    %v900 = vsel %vm64, %v829, 0
    %v903 = vsel %vm64, %v830, 0
    %v906 = vsel %vm64, %v831, 0
    %v909 = vsel %vm64, %v832, 0
    %v912 = vsel %vm64, %v833, 0
    %v915 = vsel %vm64, %v834, 0
    %v918 = vsel %vm64, %v835, 0
    %v921 = vsel %vm64, %v836, 0
    %v924 = vsel %vm64, %v837, 0
    %v927 = vsel %vm64, %v838, 0
    %v930 = vsel %vm64, %v839, 0
    %v933 = vsel %vm64, %v840, 0
    %v936 = vsel %vm64, %v841, 0
    %938 = vmatprep.subr.mxu0 0.0
    %939 = vmatpush1.msra.mxu0 0.0
    %940 = vmatprep.subr.mxu0 0.0
    %941 = vmatpush1.msra.mxu0 0.0
    %942 = vmatprep.subr.mxu0 0.0
    %943 = vmatpush1.msra.mxu0 0.0
    %944 = vmatprep.subr.mxu0 0.0
    %945 = vmatpush1.msra.mxu0 0.0
    %946 = vmatprep.subr.mxu0 0.0
    %947 = vmatpush1.msra.mxu0 0.0
    %948 = vmatprep.subr.mxu0 0.0
    %949 = vmatpush1.msra.mxu0 0.0
    %950 = vmatprep.subr.mxu0 0.0
    %951 = vmatpush1.msra.mxu0 0.0
    %952 = vmatprep.subr.mxu0 0.0
    %953 = vmatpush1.msra.mxu0 0.0
    %954 = vmatprep.subr.mxu0 0.0
    %955 = vmatpush1.msra.mxu0 0.0
    %956 = vmatprep.subr.mxu0 0.0
    %957 = vmatpush1.msra.mxu0 0.0
    %958 = vmatprep.subr.mxu0 0.0
    %959 = vmatpush1.msra.mxu0 0.0
    %960 = vmatprep.subr.mxu0 0.0
    %961 = vmatpush1.msra.mxu0 0.0
    %962 = vmatprep.subr.mxu0 0.0
    %963 = vmatpush1.msra.mxu0 0.0
    %964 = vmatprep.subr.mxu0 0.0
    %965 = vmatpush1.msra.mxu0 0.0
    %966 = vmatprep.subr.mxu0 0.0
    %967 = vmatpush1.msra.mxu0 %v61
    %968 = vmatprep.subr.mxu0 0.0
    %969 = vmatpush1.msra.mxu0 %v60
    %970 = vmatprep.subr.mxu0 0.0
    %971 = vmatpush2.msra.mxu0 0.0
    %972 = vmatprep.subr.mxu0 0.0
    %973 = vmatpush2.msra.mxu0 0.0
    %974 = vmatprep.subr.mxu0 0.0
    %975 = vmatpush2.msra.mxu0 0.0
    %976 = vmatprep.subr.mxu0 0.0
    %977 = vmatpush2.msra.mxu0 0.0
    %978 = vmatprep.subr.mxu0 0.0
    %979 = vmatpush2.msra.mxu0 0.0
    %980 = vmatprep.subr.mxu0 0.0
    %981 = vmatpush2.msra.mxu0 0.0
    %982 = vmatprep.subr.mxu0 0.0
    %983 = vmatpush2.msra.mxu0 0.0
    %984 = vmatprep.subr.mxu0 0.0
    %985 = vmatpush2.msra.mxu0 0.0
    %986 = vmatprep.subr.mxu0 0.0
    %987 = vmatpush2.msra.mxu0 0.0
    %988 = vmatprep.subr.mxu0 0.0
    %989 = vmatpush2.msra.mxu0 0.0
    %990 = vmatprep.subr.mxu0 0.0
    %991 = vmatpush2.msra.mxu0 0.0
    %992 = vmatprep.subr.mxu0 0.0
    %993 = vmatpush2.msra.mxu0 0.0
    %994 = vmatprep.subr.mxu0 0.0
    %995 = vmatpush2.msra.mxu0 0.0
    %996 = vmatprep.subr.mxu0 0.0
    %997 = vmatpush2.msra.mxu0 0.0
    %998 = vmatprep.subr.mxu0 0.0
    %999 = vmatpush2.msra.mxu0 0.0
    %1000 = vmatprep.subr.mxu0 0.0
    %1001 = vmatpush2.msra.mxu0 0.0
    %1002 = vmatprep.mubr.f32.mxu0 0.0
    %1003 = vmatmul.mubr.f32.gmra.mxu0 %v843
    %v1004 = vpop.f32.mrf.mxu0
    %v1005 = vadd.f32 0.0, %v1004
    %v1006 = vpop.f32.mrf.mxu0
    %1007 = vmatprep.mubr.f32.mxu0 0.0
    %1008 = vmatmul.mubr.f32.gmra.mxu0 %v846
    %v1009 = vpop.f32.mrf.mxu0
    %v1010 = vadd.f32 0.0, %v1009
    %v1011 = vpop.f32.mrf.mxu0
    %1012 = vmatprep.mubr.f32.mxu0 0.0
    %1013 = vmatmul.mubr.f32.gmra.mxu0 %v849
    %v1014 = vpop.f32.mrf.mxu0
    %v1015 = vadd.f32 0.0, %v1014
    %v1016 = vpop.f32.mrf.mxu0
    %1017 = vmatprep.mubr.f32.mxu0 0.0
    %1018 = vmatmul.mubr.f32.gmra.mxu0 %v852
    %v1019 = vpop.f32.mrf.mxu0
    %v1020 = vadd.f32 0.0, %v1019
    %v1021 = vpop.f32.mrf.mxu0
    %1022 = vmatprep.mubr.f32.mxu0 0.0
    %1023 = vmatmul.mubr.f32.gmra.mxu0 %v855
    %v1024 = vpop.f32.mrf.mxu0
    %v1025 = vadd.f32 0.0, %v1024
    %v1026 = vpop.f32.mrf.mxu0
    %1027 = vmatprep.mubr.f32.mxu0 0.0
    %1028 = vmatmul.mubr.f32.gmra.mxu0 %v858
    %v1029 = vpop.f32.mrf.mxu0
    %v1030 = vadd.f32 0.0, %v1029
    %v1031 = vpop.f32.mrf.mxu0
    %1032 = vmatprep.mubr.f32.mxu0 0.0
    %1033 = vmatmul.mubr.f32.gmra.mxu0 %v861
    %v1034 = vpop.f32.mrf.mxu0
    %v1035 = vadd.f32 0.0, %v1034
    %v1036 = vpop.f32.mrf.mxu0
    %1037 = vmatprep.mubr.f32.mxu0 0.0
    %1038 = vmatmul.mubr.f32.gmra.mxu0 %v864
    %v1039 = vpop.f32.mrf.mxu0
    %v1040 = vadd.f32 0.0, %v1039
    %v1041 = vpop.f32.mrf.mxu0
    %1042 = vmatprep.mubr.f32.mxu0 0.0
    %1043 = vmatmul.mubr.f32.gmra.mxu0 %v867
    %v1044 = vpop.f32.mrf.mxu0
    %v1045 = vadd.f32 0.0, %v1044
    %v1046 = vpop.f32.mrf.mxu0
    %1047 = vmatprep.mubr.f32.mxu0 0.0
    %1048 = vmatmul.mubr.f32.gmra.mxu0 %v870
    %v1049 = vpop.f32.mrf.mxu0
    %v1050 = vadd.f32 0.0, %v1049
    %v1051 = vpop.f32.mrf.mxu0
    %1052 = vmatprep.mubr.f32.mxu0 0.0
    %1053 = vmatmul.mubr.f32.gmra.mxu0 %v873
    %v1054 = vpop.f32.mrf.mxu0
    %v1055 = vadd.f32 0.0, %v1054
    %v1056 = vpop.f32.mrf.mxu0
    %1057 = vmatprep.mubr.f32.mxu0 0.0
    %1058 = vmatmul.mubr.f32.gmra.mxu0 %v876
    %v1059 = vpop.f32.mrf.mxu0
    %v1060 = vadd.f32 0.0, %v1059
    %v1061 = vpop.f32.mrf.mxu0
    %1062 = vmatprep.mubr.f32.mxu0 0.0
    %1063 = vmatmul.mubr.f32.gmra.mxu0 %v879
    %v1064 = vpop.f32.mrf.mxu0
    %v1065 = vadd.f32 0.0, %v1064
    %v1066 = vpop.f32.mrf.mxu0
    %1067 = vmatprep.mubr.f32.mxu0 0.0
    %1068 = vmatmul.mubr.f32.gmra.mxu0 %v882
    %v1069 = vpop.f32.mrf.mxu0
    %v1070 = vadd.f32 0.0, %v1069
    %v1071 = vpop.f32.mrf.mxu0
    %1072 = vmatprep.mubr.f32.mxu0 0.0
    %1073 = vmatmul.mubr.f32.gmra.mxu0 %v885
    %v1074 = vpop.f32.mrf.mxu0
    %v1075 = vadd.f32 0.0, %v1074
    %v1076 = vpop.f32.mrf.mxu0
    %1077 = vmatprep.mubr.f32.mxu0 0.0
    %1078 = vmatmul.mubr.f32.gmra.mxu0 %v888
    %v1079 = vpop.f32.mrf.mxu0
    %v1080 = vadd.f32 0.0, %v1079
    %v1081 = vpop.f32.mrf.mxu0
    %1082 = vmatprep.mubr.f32.mxu0 0.0
    %1083 = vmatmul.mubr.f32.gmra.mxu0 %v891
    %v1084 = vpop.f32.mrf.mxu0
    %v1085 = vadd.f32 0.0, %v1084
    %v1086 = vpop.f32.mrf.mxu0
    %1087 = vmatprep.mubr.f32.mxu0 0.0
    %1088 = vmatmul.mubr.f32.gmra.mxu0 %v894
    %v1089 = vpop.f32.mrf.mxu0
    %v1090 = vadd.f32 0.0, %v1089
    %v1091 = vpop.f32.mrf.mxu0
    %1092 = vmatprep.mubr.f32.mxu0 0.0
    %1093 = vmatmul.mubr.f32.gmra.mxu0 %v897
    %v1094 = vpop.f32.mrf.mxu0
    %v1095 = vadd.f32 0.0, %v1094
    %v1096 = vpop.f32.mrf.mxu0
    %1097 = vmatprep.mubr.f32.mxu0 0.0
    %1098 = vmatmul.mubr.f32.gmra.mxu0 %v900
    %v1099 = vpop.f32.mrf.mxu0
    %v1100 = vadd.f32 0.0, %v1099
    %v1101 = vpop.f32.mrf.mxu0
    %1102 = vmatprep.mubr.f32.mxu0 0.0
    %1103 = vmatmul.mubr.f32.gmra.mxu0 %v903
    %v1104 = vpop.f32.mrf.mxu0
    %v1105 = vadd.f32 0.0, %v1104
    %v1106 = vpop.f32.mrf.mxu0
    %1107 = vmatprep.mubr.f32.mxu0 0.0
    %1108 = vmatmul.mubr.f32.gmra.mxu0 %v906
    %v1109 = vpop.f32.mrf.mxu0
    %v1110 = vadd.f32 0.0, %v1109
    %v1111 = vpop.f32.mrf.mxu0
    %1112 = vmatprep.mubr.f32.mxu0 0.0
    %1113 = vmatmul.mubr.f32.gmra.mxu0 %v909
    %v1114 = vpop.f32.mrf.mxu0
    %v1115 = vadd.f32 0.0, %v1114
    %v1116 = vpop.f32.mrf.mxu0
    %1117 = vmatprep.mubr.f32.mxu0 0.0
    %1118 = vmatmul.mubr.f32.gmra.mxu0 %v912
    %v1119 = vpop.f32.mrf.mxu0
    %v1120 = vadd.f32 0.0, %v1119
    %v1121 = vpop.f32.mrf.mxu0
    %1122 = vmatprep.mubr.f32.mxu0 0.0
    %1123 = vmatmul.mubr.f32.gmra.mxu0 %v915
    %v1124 = vpop.f32.mrf.mxu0
    %v1125 = vadd.f32 0.0, %v1124
    %v1126 = vpop.f32.mrf.mxu0
    %1127 = vmatprep.mubr.f32.mxu0 0.0
    %1128 = vmatmul.mubr.f32.gmra.mxu0 %v918
    %v1129 = vpop.f32.mrf.mxu0
    %v1130 = vadd.f32 0.0, %v1129
    %v1131 = vpop.f32.mrf.mxu0
    %1132 = vmatprep.mubr.f32.mxu0 0.0
    %1133 = vmatmul.mubr.f32.gmra.mxu0 %v921
    %v1134 = vpop.f32.mrf.mxu0
    %v1135 = vadd.f32 0.0, %v1134
    %v1136 = vpop.f32.mrf.mxu0
    %1137 = vmatprep.mubr.f32.mxu0 0.0
    %1138 = vmatmul.mubr.f32.gmra.mxu0 %v924
    %v1139 = vpop.f32.mrf.mxu0
    %v1140 = vadd.f32 0.0, %v1139
    %v1141 = vpop.f32.mrf.mxu0
    %1142 = vmatprep.mubr.f32.mxu0 0.0
    %1143 = vmatmul.mubr.f32.gmra.mxu0 %v927
    %v1144 = vpop.f32.mrf.mxu0
    %v1145 = vadd.f32 0.0, %v1144
    %v1146 = vpop.f32.mrf.mxu0
    %1147 = vmatprep.mubr.f32.mxu0 0.0
    %1148 = vmatmul.mubr.f32.gmra.mxu0 %v930
    %v1149 = vpop.f32.mrf.mxu0
    %v1150 = vadd.f32 0.0, %v1149
    %v1151 = vpop.f32.mrf.mxu0
    %1152 = vmatprep.mubr.f32.mxu0 0.0
    %1153 = vmatmul.mubr.f32.gmra.mxu0 %v933
    %v1154 = vpop.f32.mrf.mxu0
    %v1155 = vadd.f32 0.0, %v1154
    %v1156 = vpop.f32.mrf.mxu0
    %1157 = vmatprep.mubr.f32.mxu0 0.0
    %1158 = vmatmul.mubr.f32.gmra.mxu0 %v936
    %v1159 = vpop.f32.mrf.mxu0
    %v1160 = vadd.f32 0.0, %v1159
    %v1161 = vpop.f32.mrf.mxu0
    %1162 = vdwg.mxu0
    %vm1163 = vcmask 261120
    %1164 = vst.msk [vmem:[#allocation9] sm:$0xff] %vm1163, %v1005
    %1165 = vst.msk [vmem:[#allocation9 + $0x8] sm:$0xff] %vm1163, %v1010
    %1166 = vst.msk [vmem:[#allocation9 + $0x10] sm:$0xff] %vm1163, %v1015
    %1167 = vst.msk [vmem:[#allocation9 + $0x18] sm:$0xff] %vm1163, %v1020
    %1168 = vst.msk [vmem:[#allocation9 + $0x20] sm:$0xff] %vm1163, %v1025
    %1169 = vst.msk [vmem:[#allocation9 + $0x28] sm:$0xff] %vm1163, %v1030
    %1170 = vst.msk [vmem:[#allocation9 + $0x30] sm:$0xff] %vm1163, %v1035
    %1171 = vst.msk [vmem:[#allocation9 + $0x38] sm:$0xff] %vm1163, %v1040
    %1172 = vst.msk [vmem:[#allocation9 + $0x40] sm:$0xff] %vm1163, %v1045
    %1173 = vst.msk [vmem:[#allocation9 + $0x48] sm:$0xff] %vm1163, %v1050
    %1174 = vst.msk [vmem:[#allocation9 + $0x50] sm:$0xff] %vm1163, %v1055
    %1175 = vst.msk [vmem:[#allocation9 + $0x58] sm:$0xff] %vm1163, %v1060
    %1176 = vst.msk [vmem:[#allocation9 + $0x60] sm:$0xff] %vm1163, %v1065
    %1177 = vst.msk [vmem:[#allocation9 + $0x68] sm:$0xff] %vm1163, %v1070
    %1178 = vst.msk [vmem:[#allocation9 + $0x70] sm:$0xff] %vm1163, %v1075
    %1179 = vst.msk [vmem:[#allocation9 + $0x78] sm:$0xff] %vm1163, %v1080
    %1180 = vst.msk [vmem:[#allocation9 + $0x80] sm:$0xff] %vm1163, %v1085
    %1181 = vst.msk [vmem:[#allocation9 + $0x88] sm:$0xff] %vm1163, %v1090
    %1182 = vst.msk [vmem:[#allocation9 + $0x90] sm:$0xff] %vm1163, %v1095
    %1183 = vst.msk [vmem:[#allocation9 + $0x98] sm:$0xff] %vm1163, %v1100
    %1184 = vst.msk [vmem:[#allocation9 + $0xa0] sm:$0xff] %vm1163, %v1105
    %1185 = vst.msk [vmem:[#allocation9 + $0xa8] sm:$0xff] %vm1163, %v1110
    %1186 = vst.msk [vmem:[#allocation9 + $0xb0] sm:$0xff] %vm1163, %v1115
    %1187 = vst.msk [vmem:[#allocation9 + $0xb8] sm:$0xff] %vm1163, %v1120
    %1188 = vst.msk [vmem:[#allocation9 + $0xc0] sm:$0xff] %vm1163, %v1125
    %1189 = vst.msk [vmem:[#allocation9 + $0xc8] sm:$0xff] %vm1163, %v1130
    %1190 = vst.msk [vmem:[#allocation9 + $0xd0] sm:$0xff] %vm1163, %v1135
    %1191 = vst.msk [vmem:[#allocation9 + $0xd8] sm:$0xff] %vm1163, %v1140
    %1192 = vst.msk [vmem:[#allocation9 + $0xe0] sm:$0xff] %vm1163, %v1145
    %1193 = vst.msk [vmem:[#allocation9 + $0xe8] sm:$0xff] %vm1163, %v1150
    %1194 = vst.msk [vmem:[#allocation9 + $0xf0] sm:$0xff] %vm1163, %v1155
    %1195 = vst.msk [vmem:[#allocation9 + $0xf8] sm:$0xff] %vm1163, %v1160
    // Predicated region
    $region26: #{upsample_layer.1} parent=1 // pred_check
      _
    $region27: #{upsample_layer.1} parent=1 // pred_check_branch
      %1197 = sbr.rel (0) target = $region29
    $region28: #{upsample_layer.1} parent=1 // pred_region
      %s1199 = ssub.s32 4096, 4096
      %1200 = vsyncadd [#allocation5], %s1199
      %s1201 = sshll.u32 [#allocation9], 4
      %s1202 = int_to_ptr.vmem [resolvable:$true] %s1201
      %1207 = dma.vmem_to_hbm [thread:$0]  %s1202, 4096, %s3, [#allocation5], 128, 128, 8
    $region29: #{upsample_layer.1} parent=1 // pred_fallthru
      _
    // Predicated region
    $region30: #{upsample_layer.1} parent=1 // pred_check
      _
    $region31: #{upsample_layer.1} parent=1 // pred_check_branch
      %1209 = sbr.rel (0) target = $region33
    $region32: #{upsample_layer.1} parent=1 // pred_region
      %1210 = dma.done [#allocation5], 4096
    $region33: #{upsample_layer.1} parent=1 // pred_fallthru
      _
    %1211 = vsyncpa [#allocation4], 1
    %1212 = vsyncpa [#allocation7], 1
    %1213 = vsyncpa [#allocation5], 1

</llo_original>
